<compile_context>
chip_gen: v7x
topology: tpu7x:2x2x1
jax: 0.10.0
libtpu: 0.0.40
codegen_flags: <defaults>
</compile_context>

<pallas_src>
import functools

import jax
import jax.numpy as jnp
from jax.experimental import pallas as pl
from jax.experimental.pallas import tpu as pltpu


def _hier_gcn_kernel(hf_ref, a_in_ref, a_out_ref,
                     edge_bias_ref, out_edge_bias_ref,
                     w_gates_ref, bias_gates_ref,
                     o_ref, *, batch, dim):
    hf = hf_ref[...]                                    # (N, B*D) batch-folded features

    # One matmul per arc covers every batch element (K/N widened by the fold).
    agg_in = jnp.dot(a_in_ref[...], hf, preferred_element_type=jnp.float32)   # (N, B*D)
    agg_out = jnp.dot(a_out_ref[...], hf, preferred_element_type=jnp.float32)  # (N, B*D)

    # Single fused gate matmul: (N, B*D) @ (B*D, 3*B) -> (N, 3*B).
    gates = jnp.dot(hf, w_gates_ref[...], preferred_element_type=jnp.float32)
    gates = jax.nn.sigmoid(gates + bias_gates_ref[...])                         # (N, 3*B)

    n = hf.shape[0]

    def expand(arc):
        # Broadcast the (N, 1) gate column of each batch over that batch's D lanes.
        cols = [jnp.broadcast_to(gates[:, 3 * b + arc:3 * b + arc + 1], (n, dim))
                for b in range(batch)]
        return jnp.concatenate(cols, axis=1)                                    # (N, B*D)

    msg = ((agg_in + edge_bias_ref[...]) * expand(0)      # bottom-up (child->parent)
           + (agg_out + out_edge_bias_ref[...]) * expand(1)   # top-down (parent->child)
           + hf * expand(2))                               # self loop
    o_ref[...] = jnp.maximum(msg, 0.0).astype(o_ref.dtype)  # ReLU, lane-dense store


@jax.jit
def hierarchy_gcn_forward(h, origin_adj, adj_matrix, out_adj_matrix,
                          edge_bias, out_edge_bias,
                          gate_weight, out_gate_weight, loop_gate,
                          bias_gate, out_bias_gate):
    B, N, D = h.shape
    dtype = h.dtype

    # Hoist batch-invariant mask products out of the kernel.
    a_in = (origin_adj * adj_matrix).astype(dtype)            # (N, N)
    a_out = (origin_adj.T * out_adj_matrix).astype(dtype)     # (N, N)

    # Fold batch into the feature/lane axis: (B, N, D) -> (N, B*D).
    h_fold = jnp.transpose(h, (1, 0, 2)).reshape(N, B * D)
    edge_bias_f = jnp.tile(edge_bias, (1, B))                 # (N, B*D)
    out_edge_bias_f = jnp.tile(out_edge_bias, (1, B))         # (N, B*D)

    # Fuse the three (D,1) gate weights into one block-diagonal (B*D, 3*B)
    # matrix so all gates come from a single MXU push.
    w3 = jnp.concatenate([gate_weight, out_gate_weight, loop_gate], axis=1)   # (D, 3)
    w_gates = jnp.kron(jnp.eye(B, dtype=dtype), w3)                           # (B*D, 3*B)
    bias3 = jnp.concatenate([bias_gate, out_bias_gate,
                             jnp.zeros_like(bias_gate)], axis=1)              # (N, 3)
    bias_gates = jnp.tile(bias3, (1, B))                                      # (N, 3*B)

    vmem = pl.BlockSpec(memory_space=pltpu.MemorySpace.VMEM)
    out_fold = pl.pallas_call(
        functools.partial(_hier_gcn_kernel, batch=B, dim=D),
        out_shape=jax.ShapeDtypeStruct((N, B * D), dtype),
        in_specs=[vmem] * 7,
        out_specs=vmem,
    )(h_fold, a_in, a_out, edge_bias_f, out_edge_bias_f, w_gates, bias_gates)

    # Unfold back to (B, N, D).
    return jnp.transpose(out_fold.reshape(N, B, D), (1, 0, 2))


def _reference_forward(h, origin_adj, adj_matrix, out_adj_matrix,
                       edge_bias, out_edge_bias,
                       gate_weight, out_gate_weight, loop_gate,
                       bias_gate, out_bias_gate):
    """Plain-JAX mirror of HierarchyGCNModule.forward (dropout p=0)."""
    h_in = jnp.einsum("nm,bmd->bnd", origin_adj * adj_matrix, h)
    in_ = h_in + edge_bias
    in_gate = jnp.einsum("bnd,do->bno", h, gate_weight) + bias_gate
    in_ = in_ * jax.nn.sigmoid(in_gate)
    h_out = jnp.einsum("nm,bmd->bnd", origin_adj.T * out_adj_matrix, h)
    out_ = h_out + out_edge_bias
    out_gate = jnp.einsum("bnd,do->bno", h, out_gate_weight) + out_bias_gate
    out_ = out_ * jax.nn.sigmoid(out_gate)
    loop_ = h * jax.nn.sigmoid(jnp.einsum("bnd,do->bno", h, loop_gate))
    return jax.nn.relu(in_ + out_ + loop_)


def _xavier_uniform(key, shape):
    fan_in, fan_out = shape[0], shape[1]
    bound = (6.0 / (fan_in + fan_out)) ** 0.5
    return jax.random.uniform(key, shape, jnp.float32, -bound, bound)


if __name__ == "__main__":
    # batch, num_nodes, in_dim. D chosen so B*D = 128 (lane-dense folded layout).
    B, N, D = 2, 8, 64

    key = jax.random.PRNGKey(0)
    keys = jax.random.split(key, 8)

    # Synthetic hierarchy adjacencies (deterministic). Entries in [0, 1); a
    # random ~half are zeroed to mimic sparse parent/child probability masks.
    in_adj_raw = jax.random.uniform(keys[0], (N, N), jnp.float32)
    in_mask = jax.random.bernoulli(keys[1], 0.5, (N, N))
    in_adj = jnp.where(in_mask, in_adj_raw, 0.0)
    out_adj_raw = jax.random.uniform(keys[2], (N, N), jnp.float32)
    out_adj = jnp.where(in_mask.T, out_adj_raw, 0.0)

    # origin_adj = np.where(in_adj <= 0, in_adj, 1.0)
    origin_adj = jnp.where(in_adj <= 0, in_adj, 1.0)

    # Parameters (reset_parameters semantics): xavier for gates, zeros for biases.
    adj_matrix = in_adj                      # Parameter initialized from in_adj
    out_adj_matrix = out_adj                 # Parameter initialized from out_adj
    gate_weight = _xavier_uniform(keys[3], (D, 1))
    out_gate_weight = _xavier_uniform(keys[4], (D, 1))
    loop_gate = _xavier_uniform(keys[5], (D, 1))
    edge_bias = jnp.zeros((N, D), jnp.float32)
    out_edge_bias = jnp.zeros((N, D), jnp.float32)
    bias_gate = jnp.zeros((N, 1), jnp.float32)
    # out_bias_gate is never explicitly initialized in the PyTorch module
    # (uninitialized Parameter); we pick zeros deterministically.
    out_bias_gate = jnp.zeros((N, 1), jnp.float32)

    # Input label embeddings: (batch_size, N, in_dim)
    h = jax.random.normal(keys[6], (B, N, D), jnp.float32)

    out = hierarchy_gcn_forward(h, origin_adj, adj_matrix, out_adj_matrix,
                                edge_bias, out_edge_bias,
                                gate_weight, out_gate_weight, loop_gate,
                                bias_gate, out_bias_gate)
    out = jax.block_until_ready(out)

    ref = _reference_forward(h, origin_adj, adj_matrix, out_adj_matrix,
                             edge_bias, out_edge_bias,
                             gate_weight, out_gate_weight, loop_gate,
                             bias_gate, out_bias_gate)
    assert out.shape == (B, N, D)
    assert jnp.allclose(out, ref, atol=1e-5, rtol=1e-5)

    print("KERNEL_OK")
</pallas_src>

<mosaic_0001>
module attributes {stable_mosaic.version = 11 : i64} {
  func.func @_hier_gcn_kernel(%arg0: memref<8x128xf32, #tpu.memory_space<vmem>>, %arg1: memref<8x8xf32, #tpu.memory_space<vmem>>, %arg2: memref<8x8xf32, #tpu.memory_space<vmem>>, %arg3: memref<8x128xf32, #tpu.memory_space<vmem>>, %arg4: memref<8x128xf32, #tpu.memory_space<vmem>>, %arg5: memref<128x6xf32, #tpu.memory_space<vmem>>, %arg6: memref<8x6xf32, #tpu.memory_space<vmem>>, %arg7: memref<8x128xf32, #tpu.memory_space<vmem>>) attributes {dimension_semantics = [], scalar_prefetch = 0 : i64, scratch_operands = 0 : i64, tpu.core_type = #tpu.core_type<tc>} {
    %c0 = arith.constant 0 : index
    %c0_0 = arith.constant 0 : index
    %0 = vector.load %arg0[%c0, %c0_0] : memref<8x128xf32, #tpu.memory_space<vmem>>, vector<8x128xf32>
    %c0_1 = arith.constant 0 : index
    %c0_2 = arith.constant 0 : index
    %1 = vector.load %arg1[%c0_1, %c0_2] : memref<8x8xf32, #tpu.memory_space<vmem>>, vector<8x8xf32>
    %cst = arith.constant dense<0.000000e+00> : vector<8x128xf32>
    %2 = tpu.matmul %1, %0, %cst {dimension_numbers = #tpu.dot_dimension_numbers<[1], [0], [0], [1], [0, 0, 1, 1], [], []>} : vector<8x8xf32>, vector<8x128xf32>, vector<8x128xf32> -> vector<8x128xf32>
    %c0_3 = arith.constant 0 : index
    %c0_4 = arith.constant 0 : index
    %3 = vector.load %arg2[%c0_3, %c0_4] : memref<8x8xf32, #tpu.memory_space<vmem>>, vector<8x8xf32>
    %cst_5 = arith.constant dense<0.000000e+00> : vector<8x128xf32>
    %4 = tpu.matmul %3, %0, %cst_5 {dimension_numbers = #tpu.dot_dimension_numbers<[1], [0], [0], [1], [0, 0, 1, 1], [], []>} : vector<8x8xf32>, vector<8x128xf32>, vector<8x128xf32> -> vector<8x128xf32>
    %c0_6 = arith.constant 0 : index
    %c0_7 = arith.constant 0 : index
    %5 = vector.load %arg5[%c0_6, %c0_7] : memref<128x6xf32, #tpu.memory_space<vmem>>, vector<128x6xf32>
    %cst_8 = arith.constant dense<0.000000e+00> : vector<8x6xf32>
    %6 = tpu.matmul %0, %5, %cst_8 {dimension_numbers = #tpu.dot_dimension_numbers<[1], [0], [0], [1], [0, 0, 1, 1], [], []>} : vector<8x128xf32>, vector<128x6xf32>, vector<8x6xf32> -> vector<8x6xf32>
    %c0_9 = arith.constant 0 : index
    %c0_10 = arith.constant 0 : index
    %7 = vector.load %arg6[%c0_9, %c0_10] : memref<8x6xf32, #tpu.memory_space<vmem>>, vector<8x6xf32>
    %8 = arith.addf %6, %7 : vector<8x6xf32>
    %9 = arith.negf %8 : vector<8x6xf32>
    %10 = math.exp %9 : vector<8x6xf32>
    %cst_11 = arith.constant 1.000000e+00 : f32
    %11 = vector.broadcast %cst_11 : f32 to vector<8x6xf32>
    %12 = arith.addf %11, %10 : vector<8x6xf32>
    %13 = arith.divf %11, %12 : vector<8x6xf32>
    %c0_12 = arith.constant 0 : index
    %c0_13 = arith.constant 0 : index
    %14 = vector.load %arg3[%c0_12, %c0_13] : memref<8x128xf32, #tpu.memory_space<vmem>>, vector<8x128xf32>
    %15 = arith.addf %2, %14 : vector<8x128xf32>
    %16 = vector.extract_strided_slice %13 {offsets = [0, 0], sizes = [8, 1], strides = [1, 1]} : vector<8x6xf32> to vector<8x1xf32>
    %17 = vector.shape_cast %16 : vector<8x1xf32> to vector<8x1xf32>
    %18 = vector.broadcast %17 : vector<8x1xf32> to vector<8x64xf32>
    %19 = vector.extract_strided_slice %13 {offsets = [0, 3], sizes = [8, 1], strides = [1, 1]} : vector<8x6xf32> to vector<8x1xf32>
    %20 = vector.shape_cast %19 : vector<8x1xf32> to vector<8x1xf32>
    %21 = vector.broadcast %20 : vector<8x1xf32> to vector<8x64xf32>
    %22 = tpu.concatenate %18, %21 in 1 : vector<8x64xf32>, vector<8x64xf32> -> vector<8x128xf32>
    %23 = arith.mulf %15, %22 : vector<8x128xf32>
    %c0_14 = arith.constant 0 : index
    %c0_15 = arith.constant 0 : index
    %24 = vector.load %arg4[%c0_14, %c0_15] : memref<8x128xf32, #tpu.memory_space<vmem>>, vector<8x128xf32>
    %25 = arith.addf %4, %24 : vector<8x128xf32>
    %26 = vector.extract_strided_slice %13 {offsets = [0, 1], sizes = [8, 1], strides = [1, 1]} : vector<8x6xf32> to vector<8x1xf32>
    %27 = vector.shape_cast %26 : vector<8x1xf32> to vector<8x1xf32>
    %28 = vector.broadcast %27 : vector<8x1xf32> to vector<8x64xf32>
    %29 = vector.extract_strided_slice %13 {offsets = [0, 4], sizes = [8, 1], strides = [1, 1]} : vector<8x6xf32> to vector<8x1xf32>
    %30 = vector.shape_cast %29 : vector<8x1xf32> to vector<8x1xf32>
    %31 = vector.broadcast %30 : vector<8x1xf32> to vector<8x64xf32>
    %32 = tpu.concatenate %28, %31 in 1 : vector<8x64xf32>, vector<8x64xf32> -> vector<8x128xf32>
    %33 = arith.mulf %25, %32 : vector<8x128xf32>
    %34 = arith.addf %23, %33 : vector<8x128xf32>
    %35 = vector.extract_strided_slice %13 {offsets = [0, 2], sizes = [8, 1], strides = [1, 1]} : vector<8x6xf32> to vector<8x1xf32>
    %36 = vector.shape_cast %35 : vector<8x1xf32> to vector<8x1xf32>
    %37 = vector.broadcast %36 : vector<8x1xf32> to vector<8x64xf32>
    %38 = vector.extract_strided_slice %13 {offsets = [0, 5], sizes = [8, 1], strides = [1, 1]} : vector<8x6xf32> to vector<8x1xf32>
    %39 = vector.shape_cast %38 : vector<8x1xf32> to vector<8x1xf32>
    %40 = vector.broadcast %39 : vector<8x1xf32> to vector<8x64xf32>
    %41 = tpu.concatenate %37, %40 in 1 : vector<8x64xf32>, vector<8x64xf32> -> vector<8x128xf32>
    %42 = arith.mulf %0, %41 : vector<8x128xf32>
    %43 = arith.addf %34, %42 : vector<8x128xf32>
    %cst_16 = arith.constant 0.000000e+00 : f32
    %44 = vector.broadcast %cst_16 : f32 to vector<8x128xf32>
    %45 = arith.maximumf %43, %44 : vector<8x128xf32>
    %c0_17 = arith.constant 0 : index
    %c0_18 = arith.constant 0 : index
    %46 = vector.load %arg7[%c0_17, %c0_18] : memref<8x128xf32, #tpu.memory_space<vmem>>, vector<8x128xf32>
    tpu.vector_store %arg7[%c0_17, %c0_18], %45 {strides = array<i32>} : memref<8x128xf32, #tpu.memory_space<vmem>>, vector<8x128xf32>,
    return
  }
}

</mosaic_0001>

<llo_original>
// kernel: tile.29
$region0: #{tile.29}
  %s0 = inlined_call_operand.vmem [shape: f32[8,2,3], index: 0, kind: input, shape index: {}]
  %s1 = inlined_call_operand.vmem [shape: f32[8,6], index: 1, kind: output, shape index: {}]
  $region1: #{tile.29} parent=0
    #allocation0 [shape = 'u8[8192]{0}', space=vmem, size = 0x2000, scoped, tag = 'scoped mem for input reshape']
    %s3 = sshllo.u32 0, 4
    %s4 = scalar_lea.vmem %s0, 4
    %v5 = vld [vmem:[%s4] sm:%s3]
    %s6 = scalar_lea.vmem [#allocation0], 8
    %7 = vst [vmem:[%s6] sm:%s3] %v5
    %v8 = vld [vmem:[%s0] sm:%s3]
    %9 = vst [vmem:[#allocation0] sm:%s3] %v8
    %v10 = vld [vmem:[#allocation0] sm:$0x7]
    %vm11 = vcmask 64512
    %12 = vst.msk [vmem:[%s1] sm:$0x7] %vm11, %v10
    %s13 = scalar_lea.vmem [#allocation0], 8
    %v14 = vld [vmem:[%s13] sm:$0x7]
    %vm15 = vcmask 64512
    %s16 = scalar_lea.vmem %s1, 3
    %17 = vst.msk [vmem:[%s16] sm:$0x7] %vm15, %v14

// kernel: mul.16
$region0: #{mul.16}
  #allocation0 [shape = 's32[1]{0}', space=sflag, size = 0x4, scoped, tag = 'scoped memory for mul.16']
  %s0 = inlined_call_operand.vmem [shape: f32[8,8], index: 0, kind: input, shape index: {}]
  %s1 = inlined_call_operand.vmem [shape: f32[8,8], index: 1, kind: input, shape index: {}]
  %s2 = inlined_call_operand.vmem [shape: f32[8,8], index: 2, kind: output, shape index: {}]
  %v3 = vld [vmem:[%s0] sm:$0xff]
  %v4 = vld [vmem:[%s1] sm:$0xff]
  %5 = xla_tuple %v3, %v4
  %6 = xla_tuple %5
  %v7 = vmul.f32 %v3, %v4
  %8 = xla_tuple %v7
  %9 = vst [vmem:[%s2] sm:$0xff] %v7

// kernel: hierarchy_gcn_forward.1
$region0: #{hierarchy_gcn_forward.1}
  #allocation0 [shape = 'u32[]', space=smem, size = 0x4, offset = 0x4, fixed_abs, tag = 'smem constant byte address 0x4 - core index']
  #allocation1 [shape = 'u32[144,128]{1,0:T(1,128)}', space=vmem, size = 0x12000, scoped, tag = 'internal scratch']
  %s0 = inlined_call_operand.vmem [shape: f32[8,128], index: 0, kind: input, shape index: {}]
  %s1 = inlined_call_operand.vmem [shape: f32[8,8], index: 1, kind: input, shape index: {}]
  %s2 = inlined_call_operand.vmem [shape: f32[8,8], index: 2, kind: input, shape index: {}]
  %s3 = inlined_call_operand.vmem [shape: f32[8,128], index: 3, kind: input, shape index: {}]
  %s4 = inlined_call_operand.vmem [shape: f32[8,128], index: 4, kind: input, shape index: {}]
  %s5 = inlined_call_operand.vmem [shape: f32[128,6], index: 5, kind: input, shape index: {}]
  %s6 = inlined_call_operand.vmem [shape: f32[8,6], index: 6, kind: input, shape index: {}]
  %s7 = inlined_call_operand.vmem [shape: f32[8,128], index: 7, kind: output, shape index: {}]
  %s8 = sld [smem:[#allocation0]]
  $region38: #{hierarchy_gcn_forward.1} parent=0
    _
  %s10 = ssub.s32 1, %s8
  %s11 = scalar_select 0, %s10, %s8
  // Predicated region
  $region2: #{hierarchy_gcn_forward.1} parent=0 // pred_check
    _
  $region3: #{hierarchy_gcn_forward.1} parent=0 // pred_check_branch
    %13 = sbr.rel (0) target = $region5
  $region4: #{hierarchy_gcn_forward.1} parent=0 // pred_region
    _
  $region5: #{hierarchy_gcn_forward.1} parent=0 // pred_fallthru
    _
  // Predicated region
  $region6: #{hierarchy_gcn_forward.1} parent=0 // pred_check
    _
  $region7: #{hierarchy_gcn_forward.1} parent=0 // pred_check_branch
    %15 = sbr.rel (0) target = $region9
  $region8: #{hierarchy_gcn_forward.1} parent=0 // pred_region
    _
  $region9: #{hierarchy_gcn_forward.1} parent=0 // pred_fallthru
    _
  // Predicated region
  $region10: #{hierarchy_gcn_forward.1} parent=0 // pred_check
    _
  $region11: #{hierarchy_gcn_forward.1} parent=0 // pred_check_branch
    %17 = sbr.rel (0) target = $region13
  $region12: #{hierarchy_gcn_forward.1} parent=0 // pred_region
    _
  $region13: #{hierarchy_gcn_forward.1} parent=0 // pred_fallthru
    _
  // Predicated region
  $region14: #{hierarchy_gcn_forward.1} parent=0 // pred_check
    _
  $region15: #{hierarchy_gcn_forward.1} parent=0 // pred_check_branch
    %19 = sbr.rel (0) target = $region17
  $region16: #{hierarchy_gcn_forward.1} parent=0 // pred_region
    _
  $region17: #{hierarchy_gcn_forward.1} parent=0 // pred_fallthru
    _
  // Predicated region
  $region18: #{hierarchy_gcn_forward.1} parent=0 // pred_check
    _
  $region19: #{hierarchy_gcn_forward.1} parent=0 // pred_check_branch
    %21 = sbr.rel (0) target = $region21
  $region20: #{hierarchy_gcn_forward.1} parent=0 // pred_region
    _
  $region21: #{hierarchy_gcn_forward.1} parent=0 // pred_fallthru
    _
  // Predicated region
  $region22: #{hierarchy_gcn_forward.1} parent=0 // pred_check
    _
  $region23: #{hierarchy_gcn_forward.1} parent=0 // pred_check_branch
    %23 = sbr.rel (0) target = $region25
  $region24: #{hierarchy_gcn_forward.1} parent=0 // pred_region
    _
  $region25: #{hierarchy_gcn_forward.1} parent=0 // pred_fallthru
    _
  // Predicated region
  $region26: #{hierarchy_gcn_forward.1} parent=0 // pred_check
    _
  $region27: #{hierarchy_gcn_forward.1} parent=0 // pred_check_branch
    %25 = sbr.rel (0) target = $region29
  $region28: #{hierarchy_gcn_forward.1} parent=0 // pred_region
    _
  $region29: #{hierarchy_gcn_forward.1} parent=0 // pred_fallthru
    _
  %v26 = vld [vmem:[%s0] sm:$0xff]
  %v27 = vld [vmem:[%s1] sm:$0xff]
  %v28 = vld [vmem:[%s2] sm:$0xff]
  %v29 = vld [vmem:[%s5] sm:$0xff]
  %v30 = vld [vmem:[%s5 + $0x8] sm:$0xff]
  %v31 = vld [vmem:[%s5 + $0x10] sm:$0xff]
  %v32 = vld [vmem:[%s5 + $0x18] sm:$0xff]
  %v33 = vld [vmem:[%s5 + $0x20] sm:$0xff]
  %v34 = vld [vmem:[%s5 + $0x28] sm:$0xff]
  %v35 = vld [vmem:[%s5 + $0x30] sm:$0xff]
  %v36 = vld [vmem:[%s5 + $0x38] sm:$0xff]
  %v37 = vld [vmem:[%s5 + $0x40] sm:$0xff]
  %v38 = vld [vmem:[%s5 + $0x48] sm:$0xff]
  %v39 = vld [vmem:[%s5 + $0x50] sm:$0xff]
  %v40 = vld [vmem:[%s5 + $0x58] sm:$0xff]
  %v41 = vld [vmem:[%s5 + $0x60] sm:$0xff]
  %v42 = vld [vmem:[%s5 + $0x68] sm:$0xff]
  %v43 = vld [vmem:[%s5 + $0x70] sm:$0xff]
  %v44 = vld [vmem:[%s5 + $0x78] sm:$0xff]
  %v45 = vld [vmem:[%s6] sm:$0xff]
  %46 = vmatprep.subr.mxu0 0.0
  %47 = vmatpush1.msra.mxu0 %v29
  %48 = vmatprep.subr.mxu0 0.0
  %49 = vmatpush1.msra.mxu0 %v30
  %50 = vmatprep.subr.mxu0 0.0
  %51 = vmatpush1.msra.mxu0 %v31
  %52 = vmatprep.subr.mxu0 0.0
  %53 = vmatpush1.msra.mxu0 %v32
  %54 = vmatprep.subr.mxu0 0.0
  %55 = vmatpush1.msra.mxu0 %v33
  %56 = vmatprep.subr.mxu0 0.0
  %57 = vmatpush1.msra.mxu0 %v34
  %58 = vmatprep.subr.mxu0 0.0
  %59 = vmatpush1.msra.mxu0 %v35
  %60 = vmatprep.subr.mxu0 0.0
  %61 = vmatpush1.msra.mxu0 %v36
  %62 = vmatprep.subr.mxu0 0.0
  %63 = vmatpush1.msra.mxu0 %v37
  %64 = vmatprep.subr.mxu0 0.0
  %65 = vmatpush1.msra.mxu0 %v38
  %66 = vmatprep.subr.mxu0 0.0
  %67 = vmatpush1.msra.mxu0 %v39
  %68 = vmatprep.subr.mxu0 0.0
  %69 = vmatpush1.msra.mxu0 %v40
  %70 = vmatprep.subr.mxu0 0.0
  %71 = vmatpush1.msra.mxu0 %v41
  %72 = vmatprep.subr.mxu0 0.0
  %73 = vmatpush1.msra.mxu0 %v42
  %74 = vmatprep.subr.mxu0 0.0
  %75 = vmatpush1.msra.mxu0 %v43
  %76 = vmatprep.subr.mxu0 0.0
  %77 = vmatpush1.msra.mxu0 %v44
  %78 = vmatprep.subr.mxu0 0.0
  %79 = vmatpush1.msra.mxu0 0.0
  %80 = vmatprep.subr.mxu0 0.0
  %81 = vmatpush1.msra.mxu0 0.0
  %82 = vmatprep.subr.mxu0 0.0
  %83 = vmatpush1.msra.mxu0 0.0
  %84 = vmatprep.subr.mxu0 0.0
  %85 = vmatpush1.msra.mxu0 0.0
  %86 = vmatprep.subr.mxu0 0.0
  %87 = vmatpush1.msra.mxu0 0.0
  %88 = vmatprep.subr.mxu0 0.0
  %89 = vmatpush1.msra.mxu0 0.0
  %90 = vmatprep.subr.mxu0 0.0
  %91 = vmatpush1.msra.mxu0 0.0
  %92 = vmatprep.subr.mxu0 0.0
  %93 = vmatpush1.msra.mxu0 0.0
  %94 = vmatprep.subr.mxu0 0.0
  %95 = vmatpush1.msra.mxu0 0.0
  %96 = vmatprep.subr.mxu0 0.0
  %97 = vmatpush1.msra.mxu0 0.0
  %98 = vmatprep.subr.mxu0 0.0
  %99 = vmatpush1.msra.mxu0 0.0
  %100 = vmatprep.subr.mxu0 0.0
  %101 = vmatpush1.msra.mxu0 0.0
  %102 = vmatprep.subr.mxu0 0.0
  %103 = vmatpush1.msra.mxu0 0.0
  %104 = vmatprep.subr.mxu0 0.0
  %105 = vmatpush1.msra.mxu0 0.0
  %106 = vmatprep.subr.mxu0 0.0
  %107 = vmatpush1.msra.mxu0 0.0
  %108 = vmatprep.subr.mxu0 0.0
  %109 = vmatpush1.msra.mxu0 0.0
  %110 = vmatprep.mubr.f32.mxu0 0.0
  %111 = vmatmul.mubr.f32.gmra.mrb[0].mxu0 %v26
  %v112 = vpop.f32.mrb[0].mxu0
  %v113 = vadd.f32 %v45, %v112
  %v114 = vpop.f32.mrb[0].mxu0
  %115 = vdwg.mxu0
  %v116 = vxor.u32 %v113, 2147483648
  %v117 = vmul.f32 %v116, 1.442695
  %v118 = vpow.pop %v117
  %v119 = vadd.f32 %v118, 1.0
  %v120 = vrcp.pop %v119
  %v121 = vmul.f32 1.0, %v120
  %v122 = vld [vmem:[%s3] sm:$0xff]
  %vm123 = vcmask 64512
  %v125 = vsel %vm123, %v27, 0
  %127 = vmatprep.subr.mxu0 0.0
  %128 = vmatpush1.msra.mxu0 %v26
  %129 = vmatprep.subr.mxu0 0.0
  %130 = vmatpush1.msra.mxu0 0.0
  %131 = vmatprep.subr.mxu0 0.0
  %132 = vmatpush1.msra.mxu0 0.0
  %133 = vmatprep.subr.mxu0 0.0
  %134 = vmatpush1.msra.mxu0 0.0
  %135 = vmatprep.subr.mxu0 0.0
  %136 = vmatpush1.msra.mxu0 0.0
  %137 = vmatprep.subr.mxu0 0.0
  %138 = vmatpush1.msra.mxu0 0.0
  %139 = vmatprep.subr.mxu0 0.0
  %140 = vmatpush1.msra.mxu0 0.0
  %141 = vmatprep.subr.mxu0 0.0
  %142 = vmatpush1.msra.mxu0 0.0
  %143 = vmatprep.subr.mxu0 0.0
  %144 = vmatpush1.msra.mxu0 0.0
  %145 = vmatprep.subr.mxu0 0.0
  %146 = vmatpush1.msra.mxu0 0.0
  %147 = vmatprep.subr.mxu0 0.0
  %148 = vmatpush1.msra.mxu0 0.0
  %149 = vmatprep.subr.mxu0 0.0
  %150 = vmatpush1.msra.mxu0 0.0
  %151 = vmatprep.subr.mxu0 0.0
  %152 = vmatpush1.msra.mxu0 0.0
  %153 = vmatprep.subr.mxu0 0.0
  %154 = vmatpush1.msra.mxu0 0.0
  %155 = vmatprep.subr.mxu0 0.0
  %156 = vmatpush1.msra.mxu0 0.0
  %157 = vmatprep.subr.mxu0 0.0
  %158 = vmatpush1.msra.mxu0 0.0
  %159 = vmatprep.subr.mxu0 0.0
  %160 = vmatpush1.msra.mxu0 0.0
  %161 = vmatprep.subr.mxu0 0.0
  %162 = vmatpush1.msra.mxu0 0.0
  %163 = vmatprep.subr.mxu0 0.0
  %164 = vmatpush1.msra.mxu0 0.0
  %165 = vmatprep.subr.mxu0 0.0
  %166 = vmatpush1.msra.mxu0 0.0
  %167 = vmatprep.subr.mxu0 0.0
  %168 = vmatpush1.msra.mxu0 0.0
  %169 = vmatprep.subr.mxu0 0.0
  %170 = vmatpush1.msra.mxu0 0.0
  %171 = vmatprep.subr.mxu0 0.0
  %172 = vmatpush1.msra.mxu0 0.0
  %173 = vmatprep.subr.mxu0 0.0
  %174 = vmatpush1.msra.mxu0 0.0
  %175 = vmatprep.subr.mxu0 0.0
  %176 = vmatpush1.msra.mxu0 0.0
  %177 = vmatprep.subr.mxu0 0.0
  %178 = vmatpush1.msra.mxu0 0.0
  %179 = vmatprep.subr.mxu0 0.0
  %180 = vmatpush1.msra.mxu0 0.0
  %181 = vmatprep.subr.mxu0 0.0
  %182 = vmatpush1.msra.mxu0 0.0
  %183 = vmatprep.subr.mxu0 0.0
  %184 = vmatpush1.msra.mxu0 0.0
  %185 = vmatprep.subr.mxu0 0.0
  %186 = vmatpush1.msra.mxu0 0.0
  %187 = vmatprep.subr.mxu0 0.0
  %188 = vmatpush1.msra.mxu0 0.0
  %189 = vmatprep.subr.mxu0 0.0
  %190 = vmatpush1.msra.mxu0 0.0
  %191 = vmatprep.mubr.f32.mxu0 0.0
  %192 = vmatmul.mubr.f32.gmra.mrb[0].mxu0 %v125
  %v193 = vpop.f32.mrb[0].mxu0
  %v194 = vadd.f32 %v122, %v193
  %v195 = vpop.f32.mrb[0].mxu0
  %196 = vdwg.mxu0
  %198 = vset.pattern.permute.xlu0 0
  %199 = vperm.xlu0 %198, %v121
  %v200 = vpop.permute.xlu0 %199
  %202 = vset.pattern.permute.xlu0 3
  %203 = vperm.xlu0 %202, %v121
  %v204 = vpop.permute.xlu0 %203
  %vm206 = vcmask 523264
  %v207 = vsel %vm206, %v200, %v204
  %v208 = vmul.f32 %v194, %v207
  %v209 = vld [vmem:[%s4] sm:$0xff]
  %v211 = vsel %vm123, %v28, 0
  %213 = vmatprep.subr.mxu0 0.0
  %214 = vmatpush1.msra.mxu0 %v26
  %215 = vmatprep.subr.mxu0 0.0
  %216 = vmatpush1.msra.mxu0 0.0
  %217 = vmatprep.subr.mxu0 0.0
  %218 = vmatpush1.msra.mxu0 0.0
  %219 = vmatprep.subr.mxu0 0.0
  %220 = vmatpush1.msra.mxu0 0.0
  %221 = vmatprep.subr.mxu0 0.0
  %222 = vmatpush1.msra.mxu0 0.0
  %223 = vmatprep.subr.mxu0 0.0
  %224 = vmatpush1.msra.mxu0 0.0
  %225 = vmatprep.subr.mxu0 0.0
  %226 = vmatpush1.msra.mxu0 0.0
  %227 = vmatprep.subr.mxu0 0.0
  %228 = vmatpush1.msra.mxu0 0.0
  %229 = vmatprep.subr.mxu0 0.0
  %230 = vmatpush1.msra.mxu0 0.0
  %231 = vmatprep.subr.mxu0 0.0
  %232 = vmatpush1.msra.mxu0 0.0
  %233 = vmatprep.subr.mxu0 0.0
  %234 = vmatpush1.msra.mxu0 0.0
  %235 = vmatprep.subr.mxu0 0.0
  %236 = vmatpush1.msra.mxu0 0.0
  %237 = vmatprep.subr.mxu0 0.0
  %238 = vmatpush1.msra.mxu0 0.0
  %239 = vmatprep.subr.mxu0 0.0
  %240 = vmatpush1.msra.mxu0 0.0
  %241 = vmatprep.subr.mxu0 0.0
  %242 = vmatpush1.msra.mxu0 0.0
  %243 = vmatprep.subr.mxu0 0.0
  %244 = vmatpush1.msra.mxu0 0.0
  %245 = vmatprep.subr.mxu0 0.0
  %246 = vmatpush1.msra.mxu0 0.0
  %247 = vmatprep.subr.mxu0 0.0
  %248 = vmatpush1.msra.mxu0 0.0
  %249 = vmatprep.subr.mxu0 0.0
  %250 = vmatpush1.msra.mxu0 0.0
  %251 = vmatprep.subr.mxu0 0.0
  %252 = vmatpush1.msra.mxu0 0.0
  %253 = vmatprep.subr.mxu0 0.0
  %254 = vmatpush1.msra.mxu0 0.0
  %255 = vmatprep.subr.mxu0 0.0
  %256 = vmatpush1.msra.mxu0 0.0
  %257 = vmatprep.subr.mxu0 0.0
  %258 = vmatpush1.msra.mxu0 0.0
  %259 = vmatprep.subr.mxu0 0.0
  %260 = vmatpush1.msra.mxu0 0.0
  %261 = vmatprep.subr.mxu0 0.0
  %262 = vmatpush1.msra.mxu0 0.0
  %263 = vmatprep.subr.mxu0 0.0
  %264 = vmatpush1.msra.mxu0 0.0
  %265 = vmatprep.subr.mxu0 0.0
  %266 = vmatpush1.msra.mxu0 0.0
  %267 = vmatprep.subr.mxu0 0.0
  %268 = vmatpush1.msra.mxu0 0.0
  %269 = vmatprep.subr.mxu0 0.0
  %270 = vmatpush1.msra.mxu0 0.0
  %271 = vmatprep.subr.mxu0 0.0
  %272 = vmatpush1.msra.mxu0 0.0
  %273 = vmatprep.subr.mxu0 0.0
  %274 = vmatpush1.msra.mxu0 0.0
  %275 = vmatprep.subr.mxu0 0.0
  %276 = vmatpush1.msra.mxu0 0.0
  %277 = vmatprep.mubr.f32.mxu0 0.0
  %278 = vmatmul.mubr.f32.gmra.mrb[0].mxu0 %v211
  %v279 = vpop.f32.mrb[0].mxu0
  %v280 = vadd.f32 %v209, %v279
  %v281 = vpop.f32.mrb[0].mxu0
  %282 = vdwg.mxu0
  %283 = vset.pattern.permute.xlu0 1
  %284 = vperm.xlu0 %283, %v121
  %v285 = vpop.permute.xlu0 %284
  %287 = vset.pattern.permute.xlu0 4
  %288 = vperm.xlu0 %287, %v121
  %v289 = vpop.permute.xlu0 %288
  %v291 = vsel %vm206, %v285, %v289
  %v292 = vmul.f32 %v280, %v291
  %v293 = vadd.f32 %v208, %v292
  %294 = vset.pattern.permute.xlu0 2
  %295 = vperm.xlu0 %294, %v121
  %v296 = vpop.permute.xlu0 %295
  %298 = vset.pattern.permute.xlu0 5
  %299 = vperm.xlu0 %298, %v121
  %v300 = vpop.permute.xlu0 %299
  %v302 = vsel %vm206, %v296, %v300
  %v303 = vmul.f32 %v26, %v302
  %v304 = vadd.f32 %v293, %v303
  %v305 = vmax.f32 %v304, 0.0
  %306 = vst [vmem:[%s7] sm:$0xff] %v305
  // Predicated region
  $region30: #{hierarchy_gcn_forward.1} parent=0 // pred_check
    _
  $region31: #{hierarchy_gcn_forward.1} parent=0 // pred_check_branch
    %308 = sbr.rel (0) target = $region33
  $region32: #{hierarchy_gcn_forward.1} parent=0 // pred_region
    _
  $region33: #{hierarchy_gcn_forward.1} parent=0 // pred_fallthru
    _
  // Predicated region
  $region34: #{hierarchy_gcn_forward.1} parent=0 // pred_check
    _
  $region35: #{hierarchy_gcn_forward.1} parent=0 // pred_check_branch
    %310 = sbr.rel (0) target = $region37
  $region36: #{hierarchy_gcn_forward.1} parent=0 // pred_region
    _
  $region37: #{hierarchy_gcn_forward.1} parent=0 // pred_fallthru
    _

</llo_original>
